<compile_context>
chip_gen: v5e
topology: v5e:2x2
jax: 0.10.0
libtpu: 0.0.40
codegen_flags: <defaults>
</compile_context>

<pallas_src>
import jax
import jax.numpy as jnp
from jax.experimental import pallas as pl
from jax.experimental.pallas import tpu as pltpu

IN_F, HID_F, OUT_F = 3, 10, 1     # logical dims of the PyTorch module
HID_P = 128                       # padded hidden (lane) dim
W2_COLS = 8                       # padded w2 lane dim for the MXU matmul
W1_ROWS = 8                       # sublane-aligned row count for padded w1
TB_MAX = 4096                     # batch tile cap (multiple of 8; ~10 MiB VMEM)


def _fcnet_kernel(x_ref, w1_ref, b1_ref, w2_ref, b2_ref, o_ref):
    # x_ref:  (TB, 3)        w1_ref: (8, 128)   (rows 3..7 zero, cols 10..127 zero)
    # b1_ref: (1, 128)       w2_ref: (128, 8)   (rows 10..127 zero, cols 1..7 zero)
    # b2_ref: (1, 1)         o_ref:  (TB, 1)
    x = x_ref[...]
    w1 = w1_ref[...]

    # Layer 1 (3 -> 128 padded) as three rank-1 broadcast multiply-adds on the
    # VPU; avoids a K=3 MXU matmul and any lane padding of x.
    h = (x[:, 0:1] * w1[0:1, :]
         + x[:, 1:2] * w1[1:2, :]
         + x[:, 2:3] * w1[2:3, :]
         + b1_ref[...])
    h = jnp.maximum(h, 0.0)                                   # ReLU

    # Layer 2 (128 -> 8 padded) on the MXU; only column 0 is real output.
    y = jnp.dot(h, w2_ref[...], preferred_element_type=jnp.float32)
    y = y[:, 0:1] + b2_ref[...]
    o_ref[...] = jax.nn.sigmoid(y)                            # sigmoid (EUP)


def _round_up(n, m):
    return ((n + m - 1) // m) * m


def _pick_tile(B):
    """Batch tile: full batch if it fits, else up to TB_MAX with >= 2 grid steps."""
    if B <= TB_MAX:
        return B                                   # single full-extent block
    # Keep at least 2 grid steps so v7x's two TensorCores both get work,
    # while still amortizing the ~0.35 us fixed per-step pipeline overhead.
    return min(TB_MAX, _round_up(pl.cdiv(B, 2), 8))


def pad_params(w1, b1, w2, b2):
    """One-time zero-padding of weights/biases to TPU-friendly shapes.

    w1: (3, 10), b1: (10,), w2: (10, 1), b2: (1,). Zero padding is exact for
    this net (padded hidden units are ReLU(0)=0; padded w2 rows/cols are 0).
    """
    f32 = jnp.float32
    w1_p = jnp.zeros((W1_ROWS, HID_P), f32).at[:IN_F, :HID_F].set(w1.astype(f32))
    b1_p = jnp.zeros((1, HID_P), f32).at[0, :HID_F].set(b1.astype(f32))
    w2_p = jnp.zeros((HID_P, W2_COLS), f32).at[:HID_F, :OUT_F].set(w2.astype(f32))
    b2_p = jnp.zeros((1, OUT_F), f32).at[0, :OUT_F].set(b2.astype(f32))
    return w1_p, b1_p, w2_p, b2_p


def fcnet_forward(x, padded_params):
    """x: (B, 3) f32. padded_params: output of pad_params(w1, b1, w2, b2).

    Returns (B, 1) f32, matching torch.sigmoid(lay3(relu(lay1(x)))).
    """
    w1_p, b1_p, w2_p, b2_p = padded_params
    B = x.shape[0]
    x = x.astype(jnp.float32)

    TB = _pick_tile(B)
    grid = (pl.cdiv(B, TB),)

    return pl.pallas_call(
        _fcnet_kernel,
        out_shape=jax.ShapeDtypeStruct((B, OUT_F), jnp.float32),
        grid=grid,
        in_specs=[
            pl.BlockSpec((TB, IN_F), lambda i: (i, 0)),        # x: batch-tiled
            pl.BlockSpec((W1_ROWS, HID_P), lambda i: (0, 0)),  # w1: VMEM-resident
            pl.BlockSpec((1, HID_P), lambda i: (0, 0)),        # b1
            pl.BlockSpec((HID_P, W2_COLS), lambda i: (0, 0)),  # w2
            pl.BlockSpec((1, OUT_F), lambda i: (0, 0)),        # b2
        ],
        out_specs=pl.BlockSpec((TB, OUT_F), lambda i: (i, 0)),
        compiler_params=pltpu.CompilerParams(
            dimension_semantics=("parallel",),                 # megacore on v7x
        ),
    )(x, w1_p, b1_p, w2_p, b2_p)


def init_params(key):
    """Deterministic init matching nn.Linear shapes (stored as (in, out))."""
    k1, k2, k3, k4 = jax.random.split(key, 4)
    lim1 = 1.0 / jnp.sqrt(jnp.float32(IN_F))
    lim2 = 1.0 / jnp.sqrt(jnp.float32(HID_F))
    w1 = jax.random.uniform(k1, (IN_F, HID_F), jnp.float32, -lim1, lim1)
    b1 = jax.random.uniform(k2, (HID_F,), jnp.float32, -lim1, lim1)
    w2 = jax.random.uniform(k3, (HID_F, OUT_F), jnp.float32, -lim2, lim2)
    b2 = jax.random.uniform(k4, (OUT_F,), jnp.float32, -lim2, lim2)
    return w1, b1, w2, b2


if __name__ == "__main__":
    key = jax.random.PRNGKey(0)
    kx, kp = jax.random.split(key)

    B = 2
    x = jax.random.normal(kx, (B, IN_F), jnp.float32)
    w1, b1, w2, b2 = init_params(kp)

    padded = pad_params(w1, b1, w2, b2)      # one-time, off the forward path
    out = fcnet_forward(x, padded)
    out = jax.block_until_ready(out)

    # Pure-JAX reference for sanity check.
    ref = jax.nn.sigmoid(jnp.maximum(x @ w1 + b1, 0.0) @ w2 + b2)
    assert out.shape == (B, OUT_F)
    assert jnp.allclose(out, ref, atol=1e-5, rtol=1e-5)

    print("KERNEL_OK")
</pallas_src>

<mosaic_0001>
module attributes {stable_mosaic.version = 11 : i64} {
  func.func @_fcnet_kernel(%arg0: i32, %arg1: memref<2x3xf32, #tpu.memory_space<vmem>>, %arg2: memref<8x128xf32, #tpu.memory_space<vmem>>, %arg3: memref<1x128xf32, #tpu.memory_space<vmem>>, %arg4: memref<128x8xf32, #tpu.memory_space<vmem>>, %arg5: memref<1x1xf32, #tpu.memory_space<vmem>>, %arg6: memref<2x1xf32, #tpu.memory_space<vmem>>) attributes {dimension_semantics = [#tpu.dimension_semantics<parallel>], iteration_bounds = array<i64: 1>, scalar_prefetch = 0 : i64, scratch_operands = 0 : i64, tpu.core_type = #tpu.core_type<tc>, window_params = [{transform_indices = @transform_0, window_bounds = array<i64: 2, 3>}, {pipeline_mode = #tpu.pipeline_mode<synchronous>, transform_indices = @transform_1, window_bounds = array<i64: 8, 128>}, {pipeline_mode = #tpu.pipeline_mode<synchronous>, transform_indices = @transform_2, window_bounds = array<i64: 1, 128>}, {pipeline_mode = #tpu.pipeline_mode<synchronous>, transform_indices = @transform_3, window_bounds = array<i64: 128, 8>}, {pipeline_mode = #tpu.pipeline_mode<synchronous>, transform_indices = @transform_4, window_bounds = array<i64: 1, 1>}, {transform_indices = @transform_5, window_bounds = array<i64: 2, 1>}]} {
    %c0 = arith.constant 0 : index
    %c0_0 = arith.constant 0 : index
    %0 = vector.load %arg1[%c0, %c0_0] : memref<2x3xf32, #tpu.memory_space<vmem>>, vector<2x3xf32>
    %c0_1 = arith.constant 0 : index
    %c0_2 = arith.constant 0 : index
    %1 = vector.load %arg2[%c0_1, %c0_2] : memref<8x128xf32, #tpu.memory_space<vmem>>, vector<8x128xf32>
    %2 = vector.extract_strided_slice %0 {offsets = [0, 0], sizes = [2, 1], strides = [1, 1]} : vector<2x3xf32> to vector<2x1xf32>
    %3 = vector.extract_strided_slice %1 {offsets = [0, 0], sizes = [1, 128], strides = [1, 1]} : vector<8x128xf32> to vector<1x128xf32>
    %4 = vector.broadcast %2 : vector<2x1xf32> to vector<2x128xf32>
    %5 = vector.broadcast %3 : vector<1x128xf32> to vector<2x128xf32>
    %6 = arith.mulf %4, %5 : vector<2x128xf32>
    %7 = vector.extract_strided_slice %0 {offsets = [0, 1], sizes = [2, 1], strides = [1, 1]} : vector<2x3xf32> to vector<2x1xf32>
    %8 = vector.extract_strided_slice %1 {offsets = [1, 0], sizes = [1, 128], strides = [1, 1]} : vector<8x128xf32> to vector<1x128xf32>
    %9 = vector.broadcast %7 : vector<2x1xf32> to vector<2x128xf32>
    %10 = vector.broadcast %8 : vector<1x128xf32> to vector<2x128xf32>
    %11 = arith.mulf %9, %10 : vector<2x128xf32>
    %12 = arith.addf %6, %11 : vector<2x128xf32>
    %13 = vector.extract_strided_slice %0 {offsets = [0, 2], sizes = [2, 1], strides = [1, 1]} : vector<2x3xf32> to vector<2x1xf32>
    %14 = vector.extract_strided_slice %1 {offsets = [2, 0], sizes = [1, 128], strides = [1, 1]} : vector<8x128xf32> to vector<1x128xf32>
    %15 = vector.broadcast %13 : vector<2x1xf32> to vector<2x128xf32>
    %16 = vector.broadcast %14 : vector<1x128xf32> to vector<2x128xf32>
    %17 = arith.mulf %15, %16 : vector<2x128xf32>
    %18 = arith.addf %12, %17 : vector<2x128xf32>
    %c0_3 = arith.constant 0 : index
    %c0_4 = arith.constant 0 : index
    %19 = vector.load %arg3[%c0_3, %c0_4] : memref<1x128xf32, #tpu.memory_space<vmem>>, vector<1x128xf32>
    %20 = vector.broadcast %19 : vector<1x128xf32> to vector<2x128xf32>
    %21 = arith.addf %18, %20 : vector<2x128xf32>
    %cst = arith.constant 0.000000e+00 : f32
    %22 = vector.broadcast %cst : f32 to vector<2x128xf32>
    %23 = arith.maximumf %21, %22 : vector<2x128xf32>
    %c0_5 = arith.constant 0 : index
    %c0_6 = arith.constant 0 : index
    %24 = vector.load %arg4[%c0_5, %c0_6] : memref<128x8xf32, #tpu.memory_space<vmem>>, vector<128x8xf32>
    %cst_7 = arith.constant dense<0.000000e+00> : vector<2x8xf32>
    %25 = tpu.matmul %23, %24, %cst_7 {dimension_numbers = #tpu.dot_dimension_numbers<[1], [0], [0], [1], [0, 0, 1, 1], [], []>} : vector<2x128xf32>, vector<128x8xf32>, vector<2x8xf32> -> vector<2x8xf32>
    %26 = vector.extract_strided_slice %25 {offsets = [0, 0], sizes = [2, 1], strides = [1, 1]} : vector<2x8xf32> to vector<2x1xf32>
    %c0_8 = arith.constant 0 : index
    %c0_9 = arith.constant 0 : index
    %27 = vector.load %arg5[%c0_8, %c0_9] : memref<1x1xf32, #tpu.memory_space<vmem>>, vector<1x1xf32>
    %28 = vector.broadcast %27 : vector<1x1xf32> to vector<2x1xf32>
    %29 = arith.addf %26, %28 : vector<2x1xf32>
    %30 = arith.negf %29 : vector<2x1xf32>
    %31 = math.exp %30 : vector<2x1xf32>
    %cst_10 = arith.constant 1.000000e+00 : f32
    %32 = vector.broadcast %cst_10 : f32 to vector<2x1xf32>
    %33 = arith.addf %32, %31 : vector<2x1xf32>
    %34 = arith.divf %32, %33 : vector<2x1xf32>
    %c0_11 = arith.constant 0 : index
    %c0_12 = arith.constant 0 : index
    %35 = vector.load %arg6[%c0_11, %c0_12] : memref<2x1xf32, #tpu.memory_space<vmem>>, vector<2x1xf32>
    tpu.vector_store %arg6[%c0_11, %c0_12], %34 {strides = array<i32>} : memref<2x1xf32, #tpu.memory_space<vmem>>, vector<2x1xf32>,
    return
  }
  func.func @transform_0(%arg0: i32) -> (i32, i32) {
    %c0_i32 = arith.constant 0 : i32
    %c0_i32_0 = arith.constant 0 : i32
    return %arg0, %c0_i32 : i32, i32
  }
  func.func @transform_1(%arg0: i32) -> (i32, i32) {
    %c0_i32 = arith.constant 0 : i32
    %c0_i32_0 = arith.constant 0 : i32
    %c0_i32_1 = arith.constant 0 : i32
    return %c0_i32, %c0_i32_0 : i32, i32
  }
  func.func @transform_2(%arg0: i32) -> (i32, i32) {
    %c0_i32 = arith.constant 0 : i32
    %c0_i32_0 = arith.constant 0 : i32
    %c0_i32_1 = arith.constant 0 : i32
    return %c0_i32, %c0_i32_0 : i32, i32
  }
  func.func @transform_3(%arg0: i32) -> (i32, i32) {
    %c0_i32 = arith.constant 0 : i32
    %c0_i32_0 = arith.constant 0 : i32
    %c0_i32_1 = arith.constant 0 : i32
    return %c0_i32, %c0_i32_0 : i32, i32
  }
  func.func @transform_4(%arg0: i32) -> (i32, i32) {
    %c0_i32 = arith.constant 0 : i32
    %c0_i32_0 = arith.constant 0 : i32
    %c0_i32_1 = arith.constant 0 : i32
    return %c0_i32, %c0_i32_0 : i32, i32
  }
  func.func @transform_5(%arg0: i32) -> (i32, i32) {
    %c0_i32 = arith.constant 0 : i32
    %c0_i32_0 = arith.constant 0 : i32
    return %arg0, %c0_i32 : i32, i32
  }
}

</mosaic_0001>

<llo_original>
// kernel: tpu_custom_call.1
$region0: #{tpu_custom_call.1}
  #allocation0 [shape = 'u32[]', space=smem, size = 0x4, offset = 0x4, fixed_abs, tag = 'smem constant byte address 0x4 - core index']
  #allocation1 [shape = 'u32[72,128]{1,0:T(1,128)}', space=vmem, size = 0x9000, scoped, tag = 'internal scratch']
  #allocation2 [shape = 'f32[1,1]{1,0:T(1,128)S(1)}', space=vmem, size = 0x200, scoped, tag = 'scoped memory for tpu_custom_call.1']
  %s0 = inlined_call_operand.vmem [shape: f32[2,3], index: 0, kind: input, shape index: {}]
  %s1 = inlined_call_operand.vmem [shape: f32[8,128], index: 1, kind: input, shape index: {}]
  %s2 = inlined_call_operand.vmem [shape: f32[1,128], index: 2, kind: input, shape index: {}]
  %s3 = inlined_call_operand.vmem [shape: f32[128,8], index: 3, kind: input, shape index: {}]
  %s4 = inlined_call_operand.<no memory space> [shape: f32[1,1], index: 4, kind: input, shape index: {}]
  %s5 = inlined_call_operand.vmem [shape: f32[2,1], index: 5, kind: output, shape index: {}]
  %s6 = sld [smem:[#allocation0]]
  $region30: #{tpu_custom_call.1} parent=0
    _
  %s8 = ssub.s32 1, %s6
  %s9 = scalar_select 0, %s8, %s6
  %v10 = vstv %s4
  %11 = vst [vmem:[#allocation2] sm:$0x1] %v10
  // Predicated region
  $region2: #{tpu_custom_call.1} parent=0 // pred_check
    _
  $region3: #{tpu_custom_call.1} parent=0 // pred_check_branch
    %13 = sbr.rel (0) target = $region5
  $region4: #{tpu_custom_call.1} parent=0 // pred_region
    _
  $region5: #{tpu_custom_call.1} parent=0 // pred_fallthru
    _
  // Predicated region
  $region6: #{tpu_custom_call.1} parent=0 // pred_check
    _
  $region7: #{tpu_custom_call.1} parent=0 // pred_check_branch
    %15 = sbr.rel (0) target = $region9
  $region8: #{tpu_custom_call.1} parent=0 // pred_region
    _
  $region9: #{tpu_custom_call.1} parent=0 // pred_fallthru
    _
  // Predicated region
  $region10: #{tpu_custom_call.1} parent=0 // pred_check
    _
  $region11: #{tpu_custom_call.1} parent=0 // pred_check_branch
    %17 = sbr.rel (0) target = $region13
  $region12: #{tpu_custom_call.1} parent=0 // pred_region
    _
  $region13: #{tpu_custom_call.1} parent=0 // pred_fallthru
    _
  // Predicated region
  $region14: #{tpu_custom_call.1} parent=0 // pred_check
    _
  $region15: #{tpu_custom_call.1} parent=0 // pred_check_branch
    %19 = sbr.rel (0) target = $region17
  $region16: #{tpu_custom_call.1} parent=0 // pred_region
    _
  $region17: #{tpu_custom_call.1} parent=0 // pred_fallthru
    _
  // Predicated region
  $region18: #{tpu_custom_call.1} parent=0 // pred_check
    _
  $region19: #{tpu_custom_call.1} parent=0 // pred_check_branch
    %21 = sbr.rel (0) target = $region21
  $region20: #{tpu_custom_call.1} parent=0 // pred_region
    _
  $region21: #{tpu_custom_call.1} parent=0 // pred_fallthru
    _
  %v22 = vld [vmem:[%s0] sm:$0x3]
  %v23 = vld [vmem:[%s1] sm:$0xff]
  %25 = vset.pattern.permute.xlu0 0
  %26 = vperm.xlu0 %25, %v22
  %v27 = vpop.permute.xlu0 %26
  %v29 = vperm.slane %v23, 0
  %v30 = vmul.f32 %v27, %v29
  %31 = vset.pattern.permute.xlu0 1
  %32 = vperm.xlu0 %31, %v22
  %v33 = vpop.permute.xlu0 %32
  %v35 = vperm.slane %v23, 1
  %v36 = vmul.f32 %v33, %v35
  %v37 = vadd.f32 %v30, %v36
  %38 = vset.pattern.permute.xlu0 2
  %39 = vperm.xlu0 %38, %v22
  %v40 = vpop.permute.xlu0 %39
  %v42 = vperm.slane %v23, 2
  %v43 = vmul.f32 %v40, %v42
  %v44 = vadd.f32 %v37, %v43
  %v45 = vld [vmem:[%s2] sm:$0x1]
  %v47 = vperm.slane %v45, 0
  %v49 = vadd.f32 %v44, %v47
  %v50 = vmax.f32 %v49, 0.0
  %v51 = vld [vmem:[%s3] sm:$0xff]
  %v52 = vld [vmem:[%s3 + $0x8] sm:$0xff]
  %v53 = vld [vmem:[%s3 + $0x10] sm:$0xff]
  %v54 = vld [vmem:[%s3 + $0x18] sm:$0xff]
  %v55 = vld [vmem:[%s3 + $0x20] sm:$0xff]
  %v56 = vld [vmem:[%s3 + $0x28] sm:$0xff]
  %v57 = vld [vmem:[%s3 + $0x30] sm:$0xff]
  %v58 = vld [vmem:[%s3 + $0x38] sm:$0xff]
  %v59 = vld [vmem:[%s3 + $0x40] sm:$0xff]
  %v60 = vld [vmem:[%s3 + $0x48] sm:$0xff]
  %v61 = vld [vmem:[%s3 + $0x50] sm:$0xff]
  %v62 = vld [vmem:[%s3 + $0x58] sm:$0xff]
  %v63 = vld [vmem:[%s3 + $0x60] sm:$0xff]
  %v64 = vld [vmem:[%s3 + $0x68] sm:$0xff]
  %v65 = vld [vmem:[%s3 + $0x70] sm:$0xff]
  %v66 = vld [vmem:[%s3 + $0x78] sm:$0xff]
  %67 = vmatpush.msra.mxu0 %v66
  %68 = vmatpush.msra.mxu0 %v65
  %69 = vmatpush.msra.mxu0 %v64
  %70 = vmatpush.msra.mxu0 %v63
  %71 = vmatpush.msra.mxu0 %v62
  %72 = vmatpush.msra.mxu0 %v61
  %73 = vmatpush.msra.mxu0 %v60
  %74 = vmatpush.msra.mxu0 %v59
  %75 = vmatpush.msra.mxu0 %v58
  %76 = vmatpush.msra.mxu0 %v57
  %77 = vmatpush.msra.mxu0 %v56
  %78 = vmatpush.msra.mxu0 %v55
  %79 = vmatpush.msra.mxu0 %v54
  %80 = vmatpush.msra.mxu0 %v53
  %81 = vmatpush.msra.mxu0 %v52
  %82 = vmatpush.msra.mxu0 %v51
  %83 = vmatmul.f32.gmra.mxu0 %v50
  %v84 = vpop.f32.mrf.mxu0
  %v85 = vadd.f32 0.0, %v84
  %86 = vdwg.mxu0
  %v87 = vld [vmem:[#allocation2] sm:$0x1]
  %v89 = vperm.slane %v87, 0
  %v91 = vadd.f32 %v85, %v89
  %v92 = vxor.u32 %v91, 2147483648
  %v93 = vmul.f32 %v92, 1.442695
  %v94 = vpow.pop %v93
  %v95 = vadd.f32 %v94, 1.0
  %v96 = vrcp.pop %v95
  %v97 = vmul.f32 %v95, %v96
  %v98 = vsub.f32 1.0, %v97
  %v99 = vmul.f32 %v96, %v98
  %v100 = vadd.f32 %v96, %v99
  %vm101 = vweird.f32 %v95
  %vm102 = vweird.f32 %v96
  %vm103 = vmor %vm101, %vm102
  %v104 = vsel %vm103, %v96, %v100
  %v105 = vand.u32 2147483647, %v95
  %vm106 = vcmp.eq.f32.partialorder %v105, 8.507059e+37
  %v107 = vand.u32 %v95, 2147483648
  %v108 = vor.u32 1.1754944e-38, %v107
  %v109 = vsel %vm106, %v108, %v104
  %v110 = vmul.f32 1.0, %v109
  %vm111 = vcmask 1024
  %112 = vst.msk [vmem:[%s5] sm:$0x3] %vm111, %v110
  // Predicated region
  $region22: #{tpu_custom_call.1} parent=0 // pred_check
    _
  $region23: #{tpu_custom_call.1} parent=0 // pred_check_branch
    %114 = sbr.rel (0) target = $region25
  $region24: #{tpu_custom_call.1} parent=0 // pred_region
    _
  $region25: #{tpu_custom_call.1} parent=0 // pred_fallthru
    _
  // Predicated region
  $region26: #{tpu_custom_call.1} parent=0 // pred_check
    _
  $region27: #{tpu_custom_call.1} parent=0 // pred_check_branch
    %116 = sbr.rel (0) target = $region29
  $region28: #{tpu_custom_call.1} parent=0 // pred_region
    _
  $region29: #{tpu_custom_call.1} parent=0 // pred_fallthru
    _

</llo_original>
